<compile_context>
chip_gen: v7x
topology: tpu7x:2x2x1
jax: 0.10.0
libtpu: 0.0.40
codegen_flags: <defaults>
</compile_context>

<pallas_src>
import functools

import jax
import jax.numpy as jnp
from jax.experimental import pallas as pl
from jax.experimental.pallas import tpu as pltpu


def _round_up(x, m):
    return ((x + m - 1) // m) * m


def _patch_embed_ln_kernel(x_ref, w_ref, b_ref, g_ref, beta_ref, o_ref, *,
                           eps, n_real):
    """Fused (patches @ W + b) followed by LayerNorm over the last dim.

    x_ref   : (TM, Kp)  flattened patches (bf16, K zero-padded to 128-multiple)
    w_ref   : (Kp, Np)  patch-embedding weight (bf16, zero-padded)
    b_ref   : (1,  Np)  patch-embedding bias (bf16, zero-padded)
    g_ref   : (1,  Np)  LayerNorm gamma (bf16, zero-padded)
    beta_ref: (1,  Np)  LayerNorm beta (bf16, zero-padded)
    o_ref   : (TM, Np)  output patch features (bf16); padded cols are zero.
    """
    # Patch-embedding matmul on the MXU, bf16 inputs, f32 accumulation.
    y = jnp.dot(x_ref[...], w_ref[...], preferred_element_type=jnp.float32)
    y = y + b_ref[...].astype(jnp.float32)            # broadcast (1, Np)

    # Single-pass LayerNorm statistics over the *real* embedding columns.
    # Padded columns of y are exactly zero (zero-padded W and bias), so sums
    # over the padded width equal sums over the real width; divide by n_real.
    inv_n = 1.0 / n_real
    s1 = jnp.sum(y, axis=-1, keepdims=True)
    s2 = jnp.sum(y * y, axis=-1, keepdims=True)
    mean = s1 * inv_n
    var = jnp.maximum(s2 * inv_n - mean * mean, 0.0)
    inv = jax.lax.rsqrt(var + eps)
    out = (y - mean) * inv * g_ref[...].astype(jnp.float32) \
        + beta_ref[...].astype(jnp.float32)
    # gamma/beta padding is zero -> padded output columns stay exactly zero.
    o_ref[...] = out.astype(o_ref.dtype)


def patch_embed_layernorm(patches, w, b, gamma, beta, *, n_real, eps=1e-6,
                          tm=256):
    """patches: (Mp, Kp) bf16 -> (Mp, Np) bf16 patch features.

    Mp must be a multiple of tm; Kp, Np must be multiples of 128 (the wrapper
    guarantees this via zero padding).
    """
    M, K = patches.shape
    Kw, N = w.shape
    assert K == Kw and M % tm == 0 and K % 128 == 0 and N % 128 == 0

    kernel = functools.partial(_patch_embed_ln_kernel, eps=eps,
                               n_real=float(n_real))
    return pl.pallas_call(
        kernel,
        out_shape=jax.ShapeDtypeStruct((M, N), jnp.bfloat16),
        grid_spec=pltpu.PrefetchScalarGridSpec(
            num_scalar_prefetch=0,
            grid=(M // tm,),
            in_specs=[
                pl.BlockSpec((tm, K), lambda i: (i, 0)),   # patches tile (streamed)
                pl.BlockSpec((K, N), lambda i: (0, 0)),    # weight (resident)
                pl.BlockSpec((1, N), lambda i: (0, 0)),    # bias
                pl.BlockSpec((1, N), lambda i: (0, 0)),    # gamma
                pl.BlockSpec((1, N), lambda i: (0, 0)),    # beta
            ],
            out_specs=pl.BlockSpec((tm, N), lambda i: (i, 0)),
        ),
        compiler_params=pltpu.CompilerParams(
            dimension_semantics=("parallel",),
        ),
    )(patches, w, b, gamma, beta)


class VisionBackbonePallas:
    """Concrete realization of the abstract VisionBackbone forward pass."""

    def __init__(self, vision_backbone_id, image_resize_strategy,
                 default_image_size=16, image_sequence_len=1,
                 in_channels=3, patch_size=8, embed_dim=32, seed=0,
                 row_tile=256):
        self.identifier = vision_backbone_id
        self.image_resize_strategy = image_resize_strategy
        self.default_image_size = default_image_size
        self.image_sequence_len = image_sequence_len

        self._in_channels = in_channels
        self._patch_size = patch_size
        self._embed_dim = embed_dim
        self._eps = 1e-6
        self._tm = row_tile
        grid = default_image_size // patch_size
        self._num_patches = grid * grid

        # Deterministic parameter init (synthetic — no checkpoint load).
        key = jax.random.PRNGKey(seed)
        k_w, k_b, _, _ = jax.random.split(key, 4)
        patch_dim = in_channels * patch_size * patch_size
        # Conv2d(weight shape (D, C, P, P)) flattened to (C*P*P, D) matmul.
        w_f32 = jax.random.normal(k_w, (patch_dim, embed_dim), jnp.float32) * 0.02
        b_f32 = jax.random.normal(k_b, (1, embed_dim), jnp.float32) * 0.02
        g_f32 = jnp.ones((1, embed_dim), jnp.float32)
        beta_f32 = jnp.zeros((1, embed_dim), jnp.float32)

        # Pre-cast to bf16 and zero-pad K and N to 128-multiples once.
        Kp = _round_up(patch_dim, 128)
        Np = _round_up(embed_dim, 128)
        self._k_real, self._k_pad = patch_dim, Kp
        self._n_pad = Np
        self._w_padded = jnp.pad(w_f32.astype(jnp.bfloat16),
                                 ((0, Kp - patch_dim), (0, Np - embed_dim)))
        self._b_padded = jnp.pad(b_f32.astype(jnp.bfloat16),
                                 ((0, 0), (0, Np - embed_dim)))
        self._g_padded = jnp.pad(g_f32.astype(jnp.bfloat16),
                                 ((0, 0), (0, Np - embed_dim)))
        self._beta_padded = jnp.pad(beta_f32.astype(jnp.bfloat16),
                                    ((0, 0), (0, Np - embed_dim)))

    # ---- abstract-property equivalents ----
    @property
    def default_image_resolution(self):
        return (self._in_channels, self.default_image_size, self.default_image_size)

    @property
    def embed_dim(self):
        return self._embed_dim

    @property
    def num_patches(self):
        return self._num_patches

    @property
    def half_precision_dtype(self):
        return jnp.bfloat16

    def get_fsdp_wrapping_policy(self):
        # TODO(synk): FSDP wrapping policy is a torch.distributed concept; no Pallas equivalent.
        return None

    def get_image_transform(self):
        # TODO(synk): PIL-based image transforms are host-side preprocessing; not a kernel concern.
        return None

    # ---- forward ----
    def forward(self, pixel_values):
        """pixel_values: NCHW float array (B, C, H, W) ->
        patch features (B, num_patches, embed_dim) in bf16."""
        B, C, H, W = pixel_values.shape
        P = self._patch_size
        gh, gw = H // P, W // P
        M = B * gh * gw
        K = C * P * P
        N = self._embed_dim

        # Stream in half precision (bf16) to halve HBM traffic of the dominant
        # patch stream; MXU still accumulates in f32 inside the kernel.
        x = pixel_values.astype(jnp.bfloat16)

        # Patch extraction glue: NCHW -> (M, K) with (C, Ph, Pw) flatten order
        # (matches Conv2d weight layout).
        # TODO(synk): fold im2col into the kernel (BlockSpec window over NCHW)
        # to avoid this transpose's extra HBM round-trip at very large images.
        x = x.reshape(B, C, gh, P, gw, P)
        x = jnp.transpose(x, (0, 2, 4, 1, 3, 5))          # (B, gh, gw, C, P, P)
        patches = x.reshape(M, K)

        # Align M to the row tile (tm), K and N are already 128-aligned via the
        # pre-padded parameters. Zero padding is exact for the matmul and keeps
        # the output lane-dense -> unmasked vector stores.
        tm = min(self._tm, _round_up(M, 8))
        Mp = _round_up(M, tm)
        patches_p = jnp.pad(patches, ((0, Mp - M), (0, self._k_pad - K)))

        feats = patch_embed_layernorm(
            patches_p, self._w_padded, self._b_padded,
            self._g_padded, self._beta_padded,
            n_real=N, eps=self._eps, tm=tm,
        )
        feats = feats[:M, :N]
        return feats.reshape(B, gh * gw, N)

    __call__ = forward


def _reference_forward(backbone, pixel_values):
    """Pure-JAX reference (f32 math on the same bf16-rounded inputs/params)."""
    B, C, H, W = pixel_values.shape
    P = backbone._patch_size
    gh, gw = H // P, W // P
    K = C * P * P
    N = backbone.embed_dim

    x = pixel_values.astype(jnp.bfloat16).astype(jnp.float32)
    x = x.reshape(B, C, gh, P, gw, P)
    x = jnp.transpose(x, (0, 2, 4, 1, 3, 5)).reshape(B * gh * gw, K)

    w = backbone._w_padded[:K, :N].astype(jnp.float32)
    b = backbone._b_padded[:, :N].astype(jnp.float32)
    g = backbone._g_padded[:, :N].astype(jnp.float32)
    beta = backbone._beta_padded[:, :N].astype(jnp.float32)

    y = x @ w + b
    mean = jnp.mean(y, axis=-1, keepdims=True)
    var = jnp.mean((y - mean) ** 2, axis=-1, keepdims=True)
    y = (y - mean) * jax.lax.rsqrt(var + backbone._eps)
    y = y * g + beta
    return y.reshape(B, gh * gw, N)


if __name__ == "__main__":
    key = jax.random.PRNGKey(0)
    B, C, H, W = 2, 3, 16, 16
    pixel_values = jax.random.normal(key, (B, C, H, W), jnp.float32)

    backbone = VisionBackbonePallas(
        vision_backbone_id="synthetic-vit-stem",
        image_resize_strategy="resize-naive",
        default_image_size=H,
        in_channels=C,
        patch_size=8,
        embed_dim=32,
    )

    out = backbone(pixel_values)
    out = jax.block_until_ready(out)

    ref = _reference_forward(backbone, pixel_values)
    assert out.shape == (B, backbone.num_patches, backbone.embed_dim), out.shape
    assert out.dtype == jnp.bfloat16, out.dtype
    assert jnp.allclose(out.astype(jnp.float32), ref, atol=3e-2, rtol=3e-2), \
        "mismatch vs reference"

    print("KERNEL_OK")
</pallas_src>

<mosaic_0001>
module attributes {stable_mosaic.version = 11 : i64} {
  func.func @_patch_embed_ln_kernel(%arg0: i32, %arg1: memref<8x256xbf16, #tpu.memory_space<vmem>>, %arg2: memref<256x128xbf16, #tpu.memory_space<vmem>>, %arg3: memref<1x128xbf16, #tpu.memory_space<vmem>>, %arg4: memref<1x128xbf16, #tpu.memory_space<vmem>>, %arg5: memref<1x128xbf16, #tpu.memory_space<vmem>>, %arg6: memref<8x128xbf16, #tpu.memory_space<vmem>>) attributes {dimension_semantics = [#tpu.dimension_semantics<parallel>], iteration_bounds = array<i64: 1>, scalar_prefetch = 0 : i64, scratch_operands = 0 : i64, tpu.core_type = #tpu.core_type<tc>, window_params = [{transform_indices = @transform_0, window_bounds = array<i64: 8, 256>}, {pipeline_mode = #tpu.pipeline_mode<synchronous>, transform_indices = @transform_1, window_bounds = array<i64: 256, 128>}, {pipeline_mode = #tpu.pipeline_mode<synchronous>, transform_indices = @transform_2, window_bounds = array<i64: 1, 128>}, {pipeline_mode = #tpu.pipeline_mode<synchronous>, transform_indices = @transform_3, window_bounds = array<i64: 1, 128>}, {pipeline_mode = #tpu.pipeline_mode<synchronous>, transform_indices = @transform_4, window_bounds = array<i64: 1, 128>}, {transform_indices = @transform_5, window_bounds = array<i64: 8, 128>}]} {
    %c0 = arith.constant 0 : index
    %c0_0 = arith.constant 0 : index
    %0 = vector.load %arg1[%c0, %c0_0] : memref<8x256xbf16, #tpu.memory_space<vmem>>, vector<8x256xbf16>
    %c0_1 = arith.constant 0 : index
    %c0_2 = arith.constant 0 : index
    %1 = vector.load %arg2[%c0_1, %c0_2] : memref<256x128xbf16, #tpu.memory_space<vmem>>, vector<256x128xbf16>
    %cst = arith.constant dense<0.000000e+00> : vector<8x128xf32>
    %2 = tpu.matmul %0, %1, %cst {dimension_numbers = #tpu.dot_dimension_numbers<[1], [0], [0], [1], [0, 0, 1, 1], [], []>} : vector<8x256xbf16>, vector<256x128xbf16>, vector<8x128xf32> -> vector<8x128xf32>
    %c0_3 = arith.constant 0 : index
    %c0_4 = arith.constant 0 : index
    %3 = vector.load %arg3[%c0_3, %c0_4] : memref<1x128xbf16, #tpu.memory_space<vmem>>, vector<1x128xbf16>
    %4 = arith.extf %3 : vector<1x128xbf16> to vector<1x128xf32>
    %5 = vector.broadcast %4 : vector<1x128xf32> to vector<8x128xf32>
    %6 = arith.addf %2, %5 : vector<8x128xf32>
    %cst_5 = arith.constant dense<0.000000e+00> : vector<8xf32>
    %7 = vector.multi_reduction <add>, %6, %cst_5 [1] : vector<8x128xf32> to vector<8xf32>
    %8 = vector.shape_cast %7 : vector<8xf32> to vector<8x1xf32>
    %9 = arith.mulf %6, %6 : vector<8x128xf32>
    %cst_6 = arith.constant dense<0.000000e+00> : vector<8xf32>
    %10 = vector.multi_reduction <add>, %9, %cst_6 [1] : vector<8x128xf32> to vector<8xf32>
    %11 = vector.shape_cast %10 : vector<8xf32> to vector<8x1xf32>
    %cst_7 = arith.constant 3.125000e-02 : f32
    %12 = vector.broadcast %cst_7 : f32 to vector<8x1xf32>
    %13 = arith.mulf %8, %12 : vector<8x1xf32>
    %cst_8 = arith.constant 3.125000e-02 : f32
    %14 = vector.broadcast %cst_8 : f32 to vector<8x1xf32>
    %15 = arith.mulf %11, %14 : vector<8x1xf32>
    %16 = arith.mulf %13, %13 : vector<8x1xf32>
    %17 = arith.subf %15, %16 : vector<8x1xf32>
    %cst_9 = arith.constant 0.000000e+00 : f32
    %18 = vector.broadcast %cst_9 : f32 to vector<8x1xf32>
    %19 = arith.maximumf %17, %18 : vector<8x1xf32>
    %cst_10 = arith.constant 9.99999997E-7 : f32
    %20 = vector.broadcast %cst_10 : f32 to vector<8x1xf32>
    %21 = arith.addf %19, %20 : vector<8x1xf32>
    %22 = math.rsqrt %21 : vector<8x1xf32>
    %23 = vector.broadcast %13 : vector<8x1xf32> to vector<8x128xf32>
    %24 = arith.subf %6, %23 : vector<8x128xf32>
    %25 = vector.broadcast %22 : vector<8x1xf32> to vector<8x128xf32>
    %26 = arith.mulf %24, %25 : vector<8x128xf32>
    %c0_11 = arith.constant 0 : index
    %c0_12 = arith.constant 0 : index
    %27 = vector.load %arg4[%c0_11, %c0_12] : memref<1x128xbf16, #tpu.memory_space<vmem>>, vector<1x128xbf16>
    %28 = arith.extf %27 : vector<1x128xbf16> to vector<1x128xf32>
    %29 = vector.broadcast %28 : vector<1x128xf32> to vector<8x128xf32>
    %30 = arith.mulf %26, %29 : vector<8x128xf32>
    %c0_13 = arith.constant 0 : index
    %c0_14 = arith.constant 0 : index
    %31 = vector.load %arg5[%c0_13, %c0_14] : memref<1x128xbf16, #tpu.memory_space<vmem>>, vector<1x128xbf16>
    %32 = arith.extf %31 : vector<1x128xbf16> to vector<1x128xf32>
    %33 = vector.broadcast %32 : vector<1x128xf32> to vector<8x128xf32>
    %34 = arith.addf %30, %33 : vector<8x128xf32>
    %35 = arith.truncf %34 : vector<8x128xf32> to vector<8x128xbf16>
    %c0_15 = arith.constant 0 : index
    %c0_16 = arith.constant 0 : index
    %36 = vector.load %arg6[%c0_15, %c0_16] : memref<8x128xbf16, #tpu.memory_space<vmem>>, vector<8x128xbf16>
    tpu.vector_store %arg6[%c0_15, %c0_16], %35 {strides = array<i32>} : memref<8x128xbf16, #tpu.memory_space<vmem>>, vector<8x128xbf16>,
    return
  }
  func.func @transform_0(%arg0: i32) -> (i32, i32) {
    %c0_i32 = arith.constant 0 : i32
    %c0_i32_0 = arith.constant 0 : i32
    return %arg0, %c0_i32 : i32, i32
  }
  func.func @transform_1(%arg0: i32) -> (i32, i32) {
    %c0_i32 = arith.constant 0 : i32
    %c0_i32_0 = arith.constant 0 : i32
    %c0_i32_1 = arith.constant 0 : i32
    return %c0_i32, %c0_i32_0 : i32, i32
  }
  func.func @transform_2(%arg0: i32) -> (i32, i32) {
    %c0_i32 = arith.constant 0 : i32
    %c0_i32_0 = arith.constant 0 : i32
    %c0_i32_1 = arith.constant 0 : i32
    return %c0_i32, %c0_i32_0 : i32, i32
  }
  func.func @transform_3(%arg0: i32) -> (i32, i32) {
    %c0_i32 = arith.constant 0 : i32
    %c0_i32_0 = arith.constant 0 : i32
    %c0_i32_1 = arith.constant 0 : i32
    return %c0_i32, %c0_i32_0 : i32, i32
  }
  func.func @transform_4(%arg0: i32) -> (i32, i32) {
    %c0_i32 = arith.constant 0 : i32
    %c0_i32_0 = arith.constant 0 : i32
    %c0_i32_1 = arith.constant 0 : i32
    return %c0_i32, %c0_i32_0 : i32, i32
  }
  func.func @transform_5(%arg0: i32) -> (i32, i32) {
    %c0_i32 = arith.constant 0 : i32
    %c0_i32_0 = arith.constant 0 : i32
    return %arg0, %c0_i32 : i32, i32
  }
}

</mosaic_0001>

<llo_original>
// kernel: tpu_custom_call.1
$region0: #{tpu_custom_call.1}
  #allocation0 [shape = 'u32[]', space=smem, size = 0x4, offset = 0x4, fixed_abs, tag = 'smem constant byte address 0x4 - core index']
  #allocation1 [shape = 'u32[144,128]{1,0:T(1,128)}', space=vmem, size = 0x12000, scoped, tag = 'internal scratch']
  %s0 = inlined_call_operand.hbm [shape: bf16[8,256], index: 0, kind: input, shape index: {}]
  %s1 = inlined_call_operand.hbm [shape: bf16[256,128], index: 1, kind: input, shape index: {}]
  %s2 = inlined_call_operand.vmem [shape: bf16[1,128], index: 2, kind: input, shape index: {}]
  %s3 = inlined_call_operand.vmem [shape: bf16[1,128], index: 3, kind: input, shape index: {}]
  %s4 = inlined_call_operand.vmem [shape: bf16[1,128], index: 4, kind: input, shape index: {}]
  %s5 = inlined_call_operand.hbm [shape: bf16[8,128], index: 5, kind: output, shape index: {}]
  %s6 = sld [smem:[#allocation0]]
  $region38: #{tpu_custom_call.1} parent=0
    _
  %s8 = ssub.s32 1, %s6
  %s9 = scalar_select 0, %s8, %s6
  $region1: #{tpu_custom_call.1} parent=0
    #allocation2 [shape = 'u8[4096]{0}', space=vmem, size = 0x1000, scoped, tag = 'input window, operand 0, single buffered']
    #allocation3 [shape = 's32[1]{0}', space=sflag, size = 0x4, scoped, tag = 'scoped memory for tpu_custom_call.1']
    #allocation4 [shape = 's32[1]{0}', space=sflag, size = 0x4, scoped, tag = 'scoped memory for tpu_custom_call.1']
    #allocation5 [shape = 'u8[65536]{0}', space=vmem, size = 0x10000, scoped, tag = 'input window, operand 1, single buffered']
    #allocation6 [shape = 's32[1]{0}', space=sflag, size = 0x4, scoped, tag = 'scoped memory for tpu_custom_call.1']
    #allocation7 [shape = 'u8[2048]{0}', space=vmem, size = 0x800, scoped, tag = 'output window, operand 0, single buffered']
    %10 = vsyncpa [#allocation3], 0
    %11 = vsyncpa [#allocation6], 0
    %12 = vsyncpa [#allocation4], 0
    // Predicated region
    $region2: #{tpu_custom_call.1} parent=1 // pred_check
      _
    $region3: #{tpu_custom_call.1} parent=1 // pred_check_branch
      %14 = sbr.rel (0) target = $region5
    $region4: #{tpu_custom_call.1} parent=1 // pred_region
      %s16 = ssub.s32 128, 128
      %17 = vsyncadd [#allocation3], %s16
      %s19 = sshll.u32 [#allocation2], 4
      %s20 = int_to_ptr.vmem [resolvable:$true] %s19
      %22 = dma.hbm_to_vmem [thread:$0]  %s0, 128, %s20, [#allocation3]
    $region5: #{tpu_custom_call.1} parent=1 // pred_fallthru
      _
    // Predicated region
    $region6: #{tpu_custom_call.1} parent=1 // pred_check
      _
    $region7: #{tpu_custom_call.1} parent=1 // pred_check_branch
      %24 = sbr.rel (0) target = $region9
    $region8: #{tpu_custom_call.1} parent=1 // pred_region
      %s26 = ssub.s32 2048, 2048
      %27 = vsyncadd [#allocation6], %s26
      %s28 = sshll.u32 [#allocation5], 4
      %s29 = int_to_ptr.vmem [resolvable:$true] %s28
      %34 = dma.hbm_to_vmem [thread:$0]  %s1, 2048, %s29, [#allocation6], 64, 64, 4
    $region9: #{tpu_custom_call.1} parent=1 // pred_fallthru
      _
    // Predicated region
    $region10: #{tpu_custom_call.1} parent=1 // pred_check
      _
    $region11: #{tpu_custom_call.1} parent=1 // pred_check_branch
      %36 = sbr.rel (0) target = $region13
    $region12: #{tpu_custom_call.1} parent=1 // pred_region
      _
    $region13: #{tpu_custom_call.1} parent=1 // pred_fallthru
      _
    // Predicated region
    $region14: #{tpu_custom_call.1} parent=1 // pred_check
      _
    $region15: #{tpu_custom_call.1} parent=1 // pred_check_branch
      %38 = sbr.rel (0) target = $region17
    $region16: #{tpu_custom_call.1} parent=1 // pred_region
      _
    $region17: #{tpu_custom_call.1} parent=1 // pred_fallthru
      _
    // Predicated region
    $region18: #{tpu_custom_call.1} parent=1 // pred_check
      _
    $region19: #{tpu_custom_call.1} parent=1 // pred_check_branch
      %40 = sbr.rel (0) target = $region21
    $region20: #{tpu_custom_call.1} parent=1 // pred_region
      _
    $region21: #{tpu_custom_call.1} parent=1 // pred_fallthru
      _
    // Predicated region
    $region22: #{tpu_custom_call.1} parent=1 // pred_check
      _
    $region23: #{tpu_custom_call.1} parent=1 // pred_check_branch
      %42 = sbr.rel (0) target = $region25
    $region24: #{tpu_custom_call.1} parent=1 // pred_region
      %43 = dma.done [#allocation3], 128
    $region25: #{tpu_custom_call.1} parent=1 // pred_fallthru
      _
    // Predicated region
    $region26: #{tpu_custom_call.1} parent=1 // pred_check
      _
    $region27: #{tpu_custom_call.1} parent=1 // pred_check_branch
      %45 = sbr.rel (0) target = $region29
    $region28: #{tpu_custom_call.1} parent=1 // pred_region
      %46 = dma.done [#allocation6], 2048
    $region29: #{tpu_custom_call.1} parent=1 // pred_fallthru
      _
    %v48 = vld [vmem:[#allocation2] sm:$0xff]
    %v49 = vld [vmem:[#allocation5] sm:$0xf]
    %v50 = vld [vmem:[#allocation5 + $0x4] sm:$0xf]
    %v51 = vld [vmem:[#allocation5 + $0x8] sm:$0xf]
    %v52 = vld [vmem:[#allocation5 + $0xc] sm:$0xf]
    %v53 = vld [vmem:[#allocation5 + $0x10] sm:$0xf]
    %v54 = vld [vmem:[#allocation5 + $0x14] sm:$0xf]
    %v55 = vld [vmem:[#allocation5 + $0x18] sm:$0xf]
    %v56 = vld [vmem:[#allocation5 + $0x1c] sm:$0xf]
    %v57 = vld [vmem:[#allocation5 + $0x20] sm:$0xf]
    %v58 = vld [vmem:[#allocation5 + $0x24] sm:$0xf]
    %v59 = vld [vmem:[#allocation5 + $0x28] sm:$0xf]
    %v60 = vld [vmem:[#allocation5 + $0x2c] sm:$0xf]
    %v61 = vld [vmem:[#allocation5 + $0x30] sm:$0xf]
    %v62 = vld [vmem:[#allocation5 + $0x34] sm:$0xf]
    %v63 = vld [vmem:[#allocation5 + $0x38] sm:$0xf]
    %v64 = vld [vmem:[#allocation5 + $0x3c] sm:$0xf]
    %v65 = vld [vmem:[#allocation5 + $0x40] sm:$0xf]
    %v66 = vld [vmem:[#allocation5 + $0x44] sm:$0xf]
    %v67 = vld [vmem:[#allocation5 + $0x48] sm:$0xf]
    %v68 = vld [vmem:[#allocation5 + $0x4c] sm:$0xf]
    %v69 = vld [vmem:[#allocation5 + $0x50] sm:$0xf]
    %v70 = vld [vmem:[#allocation5 + $0x54] sm:$0xf]
    %v71 = vld [vmem:[#allocation5 + $0x58] sm:$0xf]
    %v72 = vld [vmem:[#allocation5 + $0x5c] sm:$0xf]
    %v73 = vld [vmem:[#allocation5 + $0x60] sm:$0xf]
    %v74 = vld [vmem:[#allocation5 + $0x64] sm:$0xf]
    %v75 = vld [vmem:[#allocation5 + $0x68] sm:$0xf]
    %v76 = vld [vmem:[#allocation5 + $0x6c] sm:$0xf]
    %v77 = vld [vmem:[#allocation5 + $0x70] sm:$0xf]
    %v78 = vld [vmem:[#allocation5 + $0x74] sm:$0xf]
    %v79 = vld [vmem:[#allocation5 + $0x78] sm:$0xf]
    %v80 = vld [vmem:[#allocation5 + $0x7c] sm:$0xf]
    %v81 = vld [vmem:[%s2] sm:$0x1]
    %v82 = vunpack.c.l.bf16 %v81
    %v83 = vlaneseq
    %v84 = vshrl.u32 %v83, 7
    %v85 = vsub.s32 0, %v84
    %v86 = vrot.slane %v82, %v85
    %v88 = vunpack.c.l.b16 %v48
    %v89 = vunpack.c.h.b16 %v48
    %v90 = vpack.c.b16 %v88, %v88
    %v91 = vpack.c.b16 %v89, %v89
    %v126 = vunpack.c.l.b16 %v49
    %v127 = vunpack.c.l.b16 %v50
    %v128 = vunpack.c.l.b16 %v51
    %v129 = vunpack.c.l.b16 %v52
    %v130 = vunpack.c.l.b16 %v53
    %v131 = vunpack.c.l.b16 %v54
    %v132 = vunpack.c.l.b16 %v55
    %v133 = vunpack.c.l.b16 %v56
    %v134 = vunpack.c.l.b16 %v57
    %v135 = vunpack.c.l.b16 %v58
    %v136 = vunpack.c.l.b16 %v59
    %v137 = vunpack.c.l.b16 %v60
    %v138 = vunpack.c.l.b16 %v61
    %v139 = vunpack.c.l.b16 %v62
    %v140 = vunpack.c.l.b16 %v63
    %v141 = vunpack.c.l.b16 %v64
    %v142 = vunpack.c.l.b16 %v65
    %v143 = vunpack.c.l.b16 %v66
    %v144 = vunpack.c.l.b16 %v67
    %v145 = vunpack.c.l.b16 %v68
    %v146 = vunpack.c.l.b16 %v69
    %v147 = vunpack.c.l.b16 %v70
    %v148 = vunpack.c.l.b16 %v71
    %v149 = vunpack.c.l.b16 %v72
    %v150 = vunpack.c.l.b16 %v73
    %v151 = vunpack.c.l.b16 %v74
    %v152 = vunpack.c.l.b16 %v75
    %v153 = vunpack.c.l.b16 %v76
    %v154 = vunpack.c.l.b16 %v77
    %v155 = vunpack.c.l.b16 %v78
    %v156 = vunpack.c.l.b16 %v79
    %v157 = vunpack.c.l.b16 %v80
    %v158 = vpack.c.b16 %v127, %v126
    %v159 = vpack.c.b16 %v129, %v128
    %v160 = vpack.c.b16 %v131, %v130
    %v161 = vpack.c.b16 %v133, %v132
    %v162 = vpack.c.b16 %v135, %v134
    %v163 = vpack.c.b16 %v137, %v136
    %v164 = vpack.c.b16 %v139, %v138
    %v165 = vpack.c.b16 %v141, %v140
    %v166 = vpack.c.b16 %v143, %v142
    %v167 = vpack.c.b16 %v145, %v144
    %v168 = vpack.c.b16 %v147, %v146
    %v169 = vpack.c.b16 %v149, %v148
    %v170 = vpack.c.b16 %v151, %v150
    %v171 = vpack.c.b16 %v153, %v152
    %v172 = vpack.c.b16 %v155, %v154
    %v173 = vpack.c.b16 %v157, %v156
    %190 = vmatprep.subr.bf16.mxu0 0
    %191 = vmatpush1.bf16.msra.mxu0 %v158
    %192 = vmatprep.subr.bf16.mxu0 0
    %193 = vmatpush1.bf16.msra.mxu0 %v159
    %194 = vmatprep.subr.bf16.mxu0 0
    %195 = vmatpush1.bf16.msra.mxu0 %v160
    %196 = vmatprep.subr.bf16.mxu0 0
    %197 = vmatpush1.bf16.msra.mxu0 %v161
    %198 = vmatprep.subr.bf16.mxu0 0
    %199 = vmatpush1.bf16.msra.mxu0 %v162
    %200 = vmatprep.subr.bf16.mxu0 0
    %201 = vmatpush1.bf16.msra.mxu0 %v163
    %202 = vmatprep.subr.bf16.mxu0 0
    %203 = vmatpush1.bf16.msra.mxu0 %v164
    %204 = vmatprep.subr.bf16.mxu0 0
    %205 = vmatpush1.bf16.msra.mxu0 %v165
    %206 = vmatprep.subr.bf16.mxu0 0
    %207 = vmatpush1.bf16.msra.mxu0 %v166
    %208 = vmatprep.subr.bf16.mxu0 0
    %209 = vmatpush1.bf16.msra.mxu0 %v167
    %210 = vmatprep.subr.bf16.mxu0 0
    %211 = vmatpush1.bf16.msra.mxu0 %v168
    %212 = vmatprep.subr.bf16.mxu0 0
    %213 = vmatpush1.bf16.msra.mxu0 %v169
    %214 = vmatprep.subr.bf16.mxu0 0
    %215 = vmatpush1.bf16.msra.mxu0 %v170
    %216 = vmatprep.subr.bf16.mxu0 0
    %217 = vmatpush1.bf16.msra.mxu0 %v171
    %218 = vmatprep.subr.bf16.mxu0 0
    %219 = vmatpush1.bf16.msra.mxu0 %v172
    %220 = vmatprep.subr.bf16.mxu0 0
    %221 = vmatpush1.bf16.msra.mxu0 %v173
    %222 = vmatprep.mubr.bf16.mxu0 %v91
    %223 = vmatmul.mubr.bf16.gmra.mrb[0].mxu0 %v90
    %v224 = vpop.f32.mrb[0].mxu0
    %v225 = vadd.f32 %v86, %v224
    %v226 = vpop.f32.mrb[0].mxu0
    %v227 = vpop.f32.mrb[0].mxu0
    %v228 = vpop.f32.mrb[0].mxu0
    %229 = vdwg.mxu0
    %230 = vadd.xlane.f32.xlu0 %v225
    %v231 = vpop.xlane.xlu0 %230
    %v232 = vmul.f32 %v225, %v225
    %233 = vadd.xlane.f32.xlu0 %v232
    %v234 = vpop.xlane.xlu0 %233
    %v235 = vmul.f32 %v231, 0.03125
    %v236 = vmul.f32 %v234, 0.03125
    %v237 = vmul.f32 %v235, %v235
    %v238 = vsub.f32 %v236, %v237
    %v239 = vmax.f32 %v238, 0.0
    %v240 = vadd.f32 %v239, 1e-06
    %v241 = vrsqrt.pop %v240
    %v242 = vsub.f32 %v225, %v235
    %v243 = vmul.f32 %v242, %v241
    %v244 = vld [vmem:[%s3] sm:$0x1]
    %v245 = vunpack.c.l.bf16 %v244
    %v246 = vlaneseq
    %v247 = vshrl.u32 %v246, 7
    %v248 = vsub.s32 0, %v247
    %v249 = vrot.slane %v245, %v248
    %v250 = vmul.f32 %v243, %v249
    %v251 = vld [vmem:[%s4] sm:$0x1]
    %v252 = vunpack.c.l.bf16 %v251
    %v253 = vlaneseq
    %v254 = vshrl.u32 %v253, 7
    %v255 = vsub.s32 0, %v254
    %v256 = vrot.slane %v252, %v255
    %v257 = vadd.f32 %v250, %v256
    %v258 = vpack.c.bf16 %v257, %v257
    %259 = vst [vmem:[#allocation7] sm:$0xf] %v258
    // Predicated region
    $region30: #{tpu_custom_call.1} parent=1 // pred_check
      _
    $region31: #{tpu_custom_call.1} parent=1 // pred_check_branch
      %261 = sbr.rel (0) target = $region33
    $region32: #{tpu_custom_call.1} parent=1 // pred_region
      %s263 = ssub.s32 64, 64
      %264 = vsyncadd [#allocation4], %s263
      %s266 = sshll.u32 [#allocation7], 4
      %s267 = int_to_ptr.vmem [resolvable:$true] %s266
      %269 = dma.vmem_to_hbm [thread:$0]  %s267, 64, %s5, [#allocation4]
    $region33: #{tpu_custom_call.1} parent=1 // pred_fallthru
      _
    // Predicated region
    $region34: #{tpu_custom_call.1} parent=1 // pred_check
      _
    $region35: #{tpu_custom_call.1} parent=1 // pred_check_branch
      %271 = sbr.rel (0) target = $region37
    $region36: #{tpu_custom_call.1} parent=1 // pred_region
      %272 = dma.done [#allocation4], 64
    $region37: #{tpu_custom_call.1} parent=1 // pred_fallthru
      _
    %273 = vsyncpa [#allocation3], 1
    %274 = vsyncpa [#allocation6], 1
    %275 = vsyncpa [#allocation4], 1

</llo_original>
